<compile_context>
chip_gen: v7x
topology: tpu7x:2x2x1
jax: 0.10.0
libtpu: 0.0.40
codegen_flags: <defaults>
</compile_context>

<pallas_src>
import functools

import jax
import jax.numpy as jnp
import numpy as np
from jax.experimental import pallas as pl
from jax.experimental.pallas import tpu as pltpu

_F32 = jnp.float32


# ---------------------------------------------------------------------------
# VMEM bookkeeping helpers.
# ---------------------------------------------------------------------------
def _round_up(x, m):
    return ((x + m - 1) // m) * m


def _block_bytes(shape, dtype_bytes=4):
    """VMEM footprint of one buffer of `shape`, with (8, 128) padding on the
    trailing (sublane, lane) dims."""
    dims = list(shape)
    dims[-1] = _round_up(dims[-1], 128)
    if len(dims) >= 2:
        dims[-2] = _round_up(dims[-2], 8)
    n = 1
    for d in dims:
        n *= int(d)
    return n * dtype_bytes


def _vmem_limit_bytes():
    """~75% of physical VMEM (headroom for compiler internals), capped at
    100 MiB: ~96 MiB on v5e/v6e (128 MiB physical), ~48 MiB on v7x (64 MiB)."""
    cap = None
    try:
        cap = getattr(pltpu.get_tpu_info(), "vmem_capacity_bytes", None)
    except Exception:
        cap = None
    if not cap:
        cap = 64 * 1024 * 1024  # conservative default (v7x per-core VMEM)
    return min(int(cap) * 3 // 4, 100 * 1024 * 1024)


def _fused_footprint_bytes(C, Cr, HW, tile):
    return (
        2 * _block_bytes((1, C, tile))                      # x tile (2 bufs)
        + 2 * _block_bytes((1, C, HW))                      # resident out slab
        + 2 * (_block_bytes((Cr, C)) + _block_bytes((C, Cr))
               + _block_bytes((Cr, 1)) + _block_bytes((C, 1)))  # weights/biases
        + _block_bytes((C, 1))                              # accumulator
    )


def _pick_fused_tile(C, Cr, HW, budget, max_hw_tile=None):
    """Largest legal HW tile (multiple-of-128 divisor of HW, or HW itself as a
    full-extent block) whose fused-kernel footprint fits `budget`.  Returns
    None when nothing fits (caller falls back to the two-pass path)."""
    cands = {t for t in range(128, HW + 1, 128) if HW % t == 0}
    cands.add(HW)  # full-extent block is always layout-legal
    if max_hw_tile is not None:
        kept = {t for t in cands if t <= max_hw_tile}
        cands = kept or cands
    for t in sorted(cands, reverse=True):
        if _fused_footprint_bytes(C, Cr, HW, t) <= budget:
            return t
    return None


def _pick_c_tile(C, HW, budget):
    """Channel tile for the two-pass fallback: multiple-of-8 divisor of C (or
    C itself), chosen so pass-B's (h2, x, y) blocks fit `budget`."""
    cands = sorted({c for c in range(8, C, 8) if C % c == 0} | {C}, reverse=True)
    for c in cands:
        if 4 * _block_bytes((1, c, HW)) + 4 * _block_bytes((1, c, 1)) <= budget:
            return c
    return cands[-1]  # best effort: smallest legal tile


# ---------------------------------------------------------------------------
# Fused single-pass kernel: squeeze + excite + gate, with x resident in VMEM.
# Grid = (N, HW // tile); the HW axis is a reduction ("arbitrary").
# ---------------------------------------------------------------------------
def _se_fused_kernel(x_ref, w1_ref, b1_ref, w2_ref, b2_ref, o_ref, acc_ref,
                     *, inv_hw, tile, n_tiles):
    t = pl.program_id(1)

    @pl.when(t == 0)
    def _():
        acc_ref[...] = jnp.zeros_like(acc_ref)

    xt = x_ref[0]                                                    # (C, tile)
    acc_ref[...] += jnp.sum(xt, axis=-1, keepdims=True)              # (C, 1)

    # Stage this tile into the resident output block (doubles as x storage so
    # x never has to be re-read from HBM).
    if n_tiles == 1:
        o_ref[...] = x_ref[...]
    else:  # tile is a multiple of 128 by construction -> aligned lane store
        off = pl.multiple_of(t * tile, tile)
        o_ref[:, :, pl.ds(off, tile)] = x_ref[...]

    @pl.when(t == n_tiles - 1)
    def _():
        s = acc_ref[...] * inv_hw                                    # (C, 1)
        h1 = jnp.dot(w1_ref[...], s,
                     preferred_element_type=jnp.float32) + b1_ref[...]
        h1 = jnp.maximum(h1, 0.0)                                    # (Cr, 1)
        h2 = jnp.dot(w2_ref[...], h1,
                     preferred_element_type=jnp.float32) + b2_ref[...]  # (C, 1)
        g = h2[None] * o_ref[...]                                    # (1, C, HW)
        # sigmoid(g) = 0.5 * tanh(g / 2) + 0.5 : EUP tanh + fma, no divide.
        o_ref[...] = 0.5 * jnp.tanh(0.5 * g) + 0.5


# ---------------------------------------------------------------------------
# Two-pass fallback kernels (only for shapes whose per-batch x slab cannot be
# made resident): contiguous C-tiled, full-HW blocks.
# ---------------------------------------------------------------------------
def _pool_kernel(x_ref, s_ref, *, inv_hw):
    s_ref[...] = jnp.sum(x_ref[...], axis=-1, keepdims=True) * inv_hw


def _gate_kernel(h2_ref, x_ref, o_ref):
    g = h2_ref[...] * x_ref[...]
    o_ref[...] = 0.5 * jnp.tanh(0.5 * g) + 0.5


# ---------------------------------------------------------------------------
# Wrapper.
# ---------------------------------------------------------------------------
def se_block(x_nchw, w1, b1, w2, b2, *, force_two_pass=False, max_hw_tile=None):
    """x: (N, C, H, W); w1: (C//4, C); b1: (C//4,); w2: (C, C//4); b2: (C,)."""
    N, C, H, W = x_nchw.shape
    Cr = w1.shape[0]
    HW = H * W

    x3 = x_nchw.reshape(N, C, HW).astype(_F32)
    w1f = w1.astype(_F32)
    w2f = w2.astype(_F32)
    b1c = b1.reshape(Cr, 1).astype(_F32)
    b2c = b2.reshape(C, 1).astype(_F32)

    vmem_limit = _vmem_limit_bytes()
    budget = int(vmem_limit * 0.8)
    cparams_red = pltpu.CompilerParams(
        dimension_semantics=("parallel", "arbitrary"),
        vmem_limit_bytes=vmem_limit)
    cparams_par = pltpu.CompilerParams(
        dimension_semantics=("parallel", "parallel"),
        vmem_limit_bytes=vmem_limit)

    tile = None if force_two_pass else _pick_fused_tile(C, Cr, HW, budget,
                                                        max_hw_tile)

    if tile is not None:
        # ---- fused single pass: x read once, gated in place, y written once.
        n_t = HW // tile
        y3 = pl.pallas_call(
            functools.partial(_se_fused_kernel, inv_hw=1.0 / float(HW),
                              tile=tile, n_tiles=n_t),
            out_shape=jax.ShapeDtypeStruct((N, C, HW), _F32),
            grid_spec=pltpu.PrefetchScalarGridSpec(
                num_scalar_prefetch=0,
                grid=(N, n_t),
                in_specs=[
                    pl.BlockSpec((1, C, tile), lambda n, t: (n, 0, t)),  # x
                    pl.BlockSpec((Cr, C), lambda n, t: (0, 0)),          # W1
                    pl.BlockSpec((Cr, 1), lambda n, t: (0, 0)),          # b1
                    pl.BlockSpec((C, Cr), lambda n, t: (0, 0)),          # W2
                    pl.BlockSpec((C, 1), lambda n, t: (0, 0)),           # b2
                ],
                out_specs=pl.BlockSpec((1, C, HW), lambda n, t: (n, 0, 0)),
                scratch_shapes=[pltpu.VMEM((C, 1), _F32)],
            ),
            compiler_params=cparams_red,
            cost_estimate=pl.CostEstimate(
                flops=3 * N * C * HW + 4 * N * C * Cr,
                transcendentals=N * C * HW,
                bytes_accessed=8 * N * C * HW),
        )(x3, w1f, b1c, w2f, b2c)
        return y3.reshape(N, C, H, W)

    # ---- Two-pass fallback (huge C*HW): contiguous C-tiled full-HW slabs ----
    c_tile = _pick_c_tile(C, HW, budget)
    n_c = C // c_tile

    pooled = pl.pallas_call(
        functools.partial(_pool_kernel, inv_hw=1.0 / float(HW)),
        out_shape=jax.ShapeDtypeStruct((N, C, 1), _F32),
        grid_spec=pltpu.PrefetchScalarGridSpec(
            num_scalar_prefetch=0,
            grid=(N, n_c),
            in_specs=[pl.BlockSpec((1, c_tile, HW), lambda n, c: (n, c, 0))],
            out_specs=pl.BlockSpec((1, c_tile, 1), lambda n, c: (n, c, 0)),
        ),
        compiler_params=cparams_par,
        cost_estimate=pl.CostEstimate(
            flops=N * C * HW, transcendentals=0,
            bytes_accessed=4 * N * C * HW + 4 * N * C),
    )(x3)

    # Tiny FCs (O(N*C*Cr) flops) run as a plain-JAX epilogue in this rare path.
    s = pooled.reshape(N, C)
    h1 = jnp.maximum(s @ w1f.T + b1c.reshape(Cr), 0.0)
    h2 = (h1 @ w2f.T + b2c.reshape(C)).reshape(N, C, 1)

    y3 = pl.pallas_call(
        _gate_kernel,
        out_shape=jax.ShapeDtypeStruct((N, C, HW), _F32),
        grid_spec=pltpu.PrefetchScalarGridSpec(
            num_scalar_prefetch=0,
            grid=(N, n_c),
            in_specs=[
                pl.BlockSpec((1, c_tile, 1), lambda n, c: (n, c, 0)),    # h2
                pl.BlockSpec((1, c_tile, HW), lambda n, c: (n, c, 0)),   # x
            ],
            out_specs=pl.BlockSpec((1, c_tile, HW), lambda n, c: (n, c, 0)),
        ),
        compiler_params=cparams_par,
        cost_estimate=pl.CostEstimate(
            flops=N * C * HW, transcendentals=N * C * HW,
            bytes_accessed=8 * N * C * HW + 4 * N * C),
    )(h2, x3)
    return y3.reshape(N, C, H, W)


def se_block_ref(x, w1, b1, w2, b2):
    """Pure-JAX reference matching the PyTorch forward."""
    s = jnp.mean(x, axis=(2, 3))                     # (N, C)
    h1 = jnp.maximum(s @ w1.T + b1, 0.0)             # (N, C//4)
    h2 = h1 @ w2.T + b2                              # (N, C)
    return jax.nn.sigmoid(h2[:, :, None, None] * x)  # (N, C, H, W)


if __name__ == "__main__":
    key = jax.random.PRNGKey(0)

    def make_params(kp, C):
        Cr = C // 4
        k1, k2, k3, k4 = jax.random.split(kp, 4)
        bound1 = 1.0 / np.sqrt(C)
        w1 = jax.random.uniform(k1, (Cr, C), jnp.float32, -bound1, bound1)
        b1 = jax.random.uniform(k2, (Cr,), jnp.float32, -bound1, bound1)
        bound2 = 1.0 / np.sqrt(Cr)
        w2 = jax.random.uniform(k3, (C, Cr), jnp.float32, -bound2, bound2)
        b2 = jax.random.uniform(k4, (C,), jnp.float32, -bound2, bound2)
        return w1, b1, w2, b2

    def check(shape, kk, **kw):
        N, C, H, W = shape
        kx, kp = jax.random.split(kk)
        x = jax.random.normal(kx, shape, jnp.float32)
        w1, b1, w2, b2 = make_params(kp, C)
        y = jax.block_until_ready(se_block(x, w1, b1, w2, b2, **kw))
        y_ref = se_block_ref(x, w1, b1, w2, b2)
        np.testing.assert_allclose(np.asarray(y), np.asarray(y_ref),
                                   rtol=1e-5, atol=1e-5)

    k0, k1, k2, k3 = jax.random.split(key, 4)
    check((2, 8, 16, 16), k0)                        # fused, single HW tile
    check((2, 8, 16, 16), k1, max_hw_tile=128)       # fused, tiled HW reduction
    check((2, 8, 16, 16), k2, force_two_pass=True)   # two-pass fallback path
    check((2, 16, 7, 7), k3)                         # fused, HW not mult of 128

    print("KERNEL_OK")
</pallas_src>

<mosaic_0001>
module attributes {stable_mosaic.version = 11 : i64} {
  func.func @_se_fused_kernel(%arg0: i32, %arg1: i32, %arg2: memref<1x8x256xf32, #tpu.memory_space<vmem>>, %arg3: memref<2x8xf32, #tpu.memory_space<vmem>>, %arg4: memref<2x1xf32, #tpu.memory_space<vmem>>, %arg5: memref<8x2xf32, #tpu.memory_space<vmem>>, %arg6: memref<8x1xf32, #tpu.memory_space<vmem>>, %arg7: memref<1x8x256xf32, #tpu.memory_space<vmem>>, %arg8: memref<8x1xf32, #tpu.memory_space<vmem>>) attributes {dimension_semantics = [#tpu.dimension_semantics<parallel>, #tpu.dimension_semantics<arbitrary>], iteration_bounds = array<i64: 2, 1>, scalar_prefetch = 0 : i64, scratch_operands = 1 : i64, tpu.core_type = #tpu.core_type<tc>, window_params = [{transform_indices = @transform_0, window_bounds = array<i64: 1, 8, 256>}, {pipeline_mode = #tpu.pipeline_mode<synchronous>, transform_indices = @transform_1, window_bounds = array<i64: 2, 8>}, {pipeline_mode = #tpu.pipeline_mode<synchronous>, transform_indices = @transform_2, window_bounds = array<i64: 2, 1>}, {pipeline_mode = #tpu.pipeline_mode<synchronous>, transform_indices = @transform_3, window_bounds = array<i64: 8, 2>}, {pipeline_mode = #tpu.pipeline_mode<synchronous>, transform_indices = @transform_4, window_bounds = array<i64: 8, 1>}, {transform_indices = @transform_5, window_bounds = array<i64: 1, 8, 256>}]} {
    %c0_i32 = arith.constant 0 : i32
    %0 = arith.cmpi eq, %arg1, %c0_i32 : i32
    %1 = arith.extui %0 : i1 to i32
    %c0_i32_0 = arith.constant 0 : i32
    %2 = arith.cmpi ne, %1, %c0_i32_0 : i32
    scf.if %2 {
      %cst_15 = arith.constant 0.000000e+00 : f32
      %15 = vector.broadcast %cst_15 : f32 to vector<8x1xf32>
      %c0_16 = arith.constant 0 : index
      %c0_17 = arith.constant 0 : index
      %16 = vector.load %arg8[%c0_16, %c0_17] : memref<8x1xf32, #tpu.memory_space<vmem>>, vector<8x1xf32>
      tpu.vector_store %arg8[%c0_16, %c0_17], %15 {strides = array<i32>} : memref<8x1xf32, #tpu.memory_space<vmem>>, vector<8x1xf32>,
    } else {
    }
    %c0 = arith.constant 0 : index
    %c0_1 = arith.constant 0 : index
    %c0_2 = arith.constant 0 : index
    %3 = vector.load %arg2[%c0, %c0_1, %c0_2] : memref<1x8x256xf32, #tpu.memory_space<vmem>>, vector<1x8x256xf32>
    %4 = vector.shape_cast %3 : vector<1x8x256xf32> to vector<8x256xf32>
    %c0_3 = arith.constant 0 : index
    %c0_4 = arith.constant 0 : index
    %5 = vector.load %arg8[%c0_3, %c0_4] : memref<8x1xf32, #tpu.memory_space<vmem>>, vector<8x1xf32>
    %cst = arith.constant dense<0.000000e+00> : vector<8xf32>
    %6 = vector.multi_reduction <add>, %4, %cst [1] : vector<8x256xf32> to vector<8xf32>
    %7 = vector.shape_cast %6 : vector<8xf32> to vector<8x1xf32>
    %8 = arith.addf %5, %7 : vector<8x1xf32>
    %c0_5 = arith.constant 0 : index
    %c0_6 = arith.constant 0 : index
    %9 = vector.load %arg8[%c0_5, %c0_6] : memref<8x1xf32, #tpu.memory_space<vmem>>, vector<8x1xf32>
    tpu.vector_store %arg8[%c0_5, %c0_6], %8 {strides = array<i32>} : memref<8x1xf32, #tpu.memory_space<vmem>>, vector<8x1xf32>,
    %c0_7 = arith.constant 0 : index
    %c0_8 = arith.constant 0 : index
    %c0_9 = arith.constant 0 : index
    %10 = vector.load %arg2[%c0_7, %c0_8, %c0_9] : memref<1x8x256xf32, #tpu.memory_space<vmem>>, vector<1x8x256xf32>
    %c0_10 = arith.constant 0 : index
    %c0_11 = arith.constant 0 : index
    %c0_12 = arith.constant 0 : index
    %11 = vector.load %arg7[%c0_10, %c0_11, %c0_12] : memref<1x8x256xf32, #tpu.memory_space<vmem>>, vector<1x8x256xf32>
    tpu.vector_store %arg7[%c0_10, %c0_11, %c0_12], %10 {strides = array<i32>} : memref<1x8x256xf32, #tpu.memory_space<vmem>>, vector<1x8x256xf32>,
    %c0_i32_13 = arith.constant 0 : i32
    %12 = arith.cmpi eq, %arg1, %c0_i32_13 : i32
    %13 = arith.extui %12 : i1 to i32
    %c0_i32_14 = arith.constant 0 : i32
    %14 = arith.cmpi ne, %13, %c0_i32_14 : i32
    scf.if %14 {
      %c0_15 = arith.constant 0 : index
      %c0_16 = arith.constant 0 : index
      %15 = vector.load %arg8[%c0_15, %c0_16] : memref<8x1xf32, #tpu.memory_space<vmem>>, vector<8x1xf32>
      %cst_17 = arith.constant 3.906250e-03 : f32
      %16 = vector.broadcast %cst_17 : f32 to vector<8x1xf32>
      %17 = arith.mulf %15, %16 : vector<8x1xf32>
      %c0_18 = arith.constant 0 : index
      %c0_19 = arith.constant 0 : index
      %18 = vector.load %arg3[%c0_18, %c0_19] : memref<2x8xf32, #tpu.memory_space<vmem>>, vector<2x8xf32>
      %cst_20 = arith.constant dense<0.000000e+00> : vector<2x1xf32>
      %19 = tpu.matmul %18, %17, %cst_20 {dimension_numbers = #tpu.dot_dimension_numbers<[1], [0], [0], [1], [0, 0, 1, 1], [], []>} : vector<2x8xf32>, vector<8x1xf32>, vector<2x1xf32> -> vector<2x1xf32>
      %c0_21 = arith.constant 0 : index
      %c0_22 = arith.constant 0 : index
      %20 = vector.load %arg4[%c0_21, %c0_22] : memref<2x1xf32, #tpu.memory_space<vmem>>, vector<2x1xf32>
      %21 = arith.addf %19, %20 : vector<2x1xf32>
      %cst_23 = arith.constant 0.000000e+00 : f32
      %22 = vector.broadcast %cst_23 : f32 to vector<2x1xf32>
      %23 = arith.maximumf %21, %22 : vector<2x1xf32>
      %c0_24 = arith.constant 0 : index
      %c0_25 = arith.constant 0 : index
      %24 = vector.load %arg5[%c0_24, %c0_25] : memref<8x2xf32, #tpu.memory_space<vmem>>, vector<8x2xf32>
      %cst_26 = arith.constant dense<0.000000e+00> : vector<8x1xf32>
      %25 = tpu.matmul %24, %23, %cst_26 {dimension_numbers = #tpu.dot_dimension_numbers<[1], [0], [0], [1], [0, 0, 1, 1], [], []>} : vector<8x2xf32>, vector<2x1xf32>, vector<8x1xf32> -> vector<8x1xf32>
      %c0_27 = arith.constant 0 : index
      %c0_28 = arith.constant 0 : index
      %26 = vector.load %arg6[%c0_27, %c0_28] : memref<8x1xf32, #tpu.memory_space<vmem>>, vector<8x1xf32>
      %27 = arith.addf %25, %26 : vector<8x1xf32>
      %28 = vector.shape_cast %27 : vector<8x1xf32> to vector<1x8x1xf32>
      %c0_29 = arith.constant 0 : index
      %c0_30 = arith.constant 0 : index
      %c0_31 = arith.constant 0 : index
      %29 = vector.load %arg7[%c0_29, %c0_30, %c0_31] : memref<1x8x256xf32, #tpu.memory_space<vmem>>, vector<1x8x256xf32>
      %30 = vector.broadcast %28 : vector<1x8x1xf32> to vector<1x8x256xf32>
      %31 = arith.mulf %30, %29 : vector<1x8x256xf32>
      %cst_32 = arith.constant 5.000000e-01 : f32
      %32 = vector.broadcast %cst_32 : f32 to vector<1x8x256xf32>
      %33 = arith.mulf %32, %31 : vector<1x8x256xf32>
      %34 = math.tanh %33 : vector<1x8x256xf32>
      %cst_33 = arith.constant 5.000000e-01 : f32
      %35 = vector.broadcast %cst_33 : f32 to vector<1x8x256xf32>
      %36 = arith.mulf %35, %34 : vector<1x8x256xf32>
      %cst_34 = arith.constant 5.000000e-01 : f32
      %37 = vector.broadcast %cst_34 : f32 to vector<1x8x256xf32>
      %38 = arith.addf %36, %37 : vector<1x8x256xf32>
      %c0_35 = arith.constant 0 : index
      %c0_36 = arith.constant 0 : index
      %c0_37 = arith.constant 0 : index
      %39 = vector.load %arg7[%c0_35, %c0_36, %c0_37] : memref<1x8x256xf32, #tpu.memory_space<vmem>>, vector<1x8x256xf32>
      tpu.vector_store %arg7[%c0_35, %c0_36, %c0_37], %38 {strides = array<i32>} : memref<1x8x256xf32, #tpu.memory_space<vmem>>, vector<1x8x256xf32>,
    } else {
    }
    return
  }
  func.func @transform_0(%arg0: i32, %arg1: i32) -> (i32, i32, i32) {
    %c0_i32 = arith.constant 0 : i32
    %c0_i32_0 = arith.constant 0 : i32
    return %arg0, %c0_i32, %arg1 : i32, i32, i32
  }
  func.func @transform_1(%arg0: i32, %arg1: i32) -> (i32, i32) {
    %c0_i32 = arith.constant 0 : i32
    %c0_i32_0 = arith.constant 0 : i32
    %c0_i32_1 = arith.constant 0 : i32
    return %c0_i32, %c0_i32_0 : i32, i32
  }
  func.func @transform_2(%arg0: i32, %arg1: i32) -> (i32, i32) {
    %c0_i32 = arith.constant 0 : i32
    %c0_i32_0 = arith.constant 0 : i32
    %c0_i32_1 = arith.constant 0 : i32
    return %c0_i32, %c0_i32_0 : i32, i32
  }
  func.func @transform_3(%arg0: i32, %arg1: i32) -> (i32, i32) {
    %c0_i32 = arith.constant 0 : i32
    %c0_i32_0 = arith.constant 0 : i32
    %c0_i32_1 = arith.constant 0 : i32
    return %c0_i32, %c0_i32_0 : i32, i32
  }
  func.func @transform_4(%arg0: i32, %arg1: i32) -> (i32, i32) {
    %c0_i32 = arith.constant 0 : i32
    %c0_i32_0 = arith.constant 0 : i32
    %c0_i32_1 = arith.constant 0 : i32
    return %c0_i32, %c0_i32_0 : i32, i32
  }
  func.func @transform_5(%arg0: i32, %arg1: i32) -> (i32, i32, i32) {
    %c0_i32 = arith.constant 0 : i32
    %c0_i32_0 = arith.constant 0 : i32
    %c0_i32_1 = arith.constant 0 : i32
    return %arg0, %c0_i32, %c0_i32_0 : i32, i32, i32
  }
}

</mosaic_0001>

<llo_original>
// kernel: tpu_custom_call.1
$region0: #{tpu_custom_call.1}
  #allocation0 [shape = 'u32[]', space=smem, size = 0x4, offset = 0x4, fixed_abs, tag = 'smem constant byte address 0x4 - core index']
  #allocation1 [shape = 'u32[144,128]{1,0:T(1,128)}', space=vmem, size = 0x12000, scoped, tag = 'internal scratch']
  #allocation2 [shape = 'f32[8,1]{1,0:T(8,128)}', space=vmem, size = 0x1000, scoped, tag = 'scratch operand']
  %s0 = inlined_call_operand.hbm [shape: f32[2,8,256], index: 0, kind: input, shape index: {}]
  %s1 = inlined_call_operand.vmem [shape: f32[2,8], index: 1, kind: input, shape index: {}]
  %s2 = inlined_call_operand.vmem [shape: f32[2,1], index: 2, kind: input, shape index: {}]
  %s3 = inlined_call_operand.vmem [shape: f32[8,2], index: 3, kind: input, shape index: {}]
  %s4 = inlined_call_operand.vmem [shape: f32[8,1], index: 4, kind: input, shape index: {}]
  %s5 = inlined_call_operand.hbm [shape: f32[2,8,256], index: 5, kind: output, shape index: {}]
  %s6 = sld [smem:[#allocation0]]
  $region65: #{tpu_custom_call.1} parent=0
    _
  %s8 = ssub.s32 1, %s6
  %s9 = scalar_select 0, %s8, %s6
  $region1: #{tpu_custom_call.1} parent=0
    #allocation3 [shape = 'u8[16384]{0}', space=vmem, size = 0x4000, scoped, tag = 'input window, operand 0']
    #allocation4 [shape = 's32[2]{0}', space=sflag, size = 0x8, scoped, tag = 'scoped memory for tpu_custom_call.1']
    #allocation5 [shape = 's32[2]{0}', space=sflag, size = 0x8, scoped, tag = 'scoped memory for tpu_custom_call.1']
    #allocation6 [shape = 'u8[16384]{0}', space=vmem, size = 0x4000, scoped, tag = 'output window, operand 0']
    %10 = vsyncpa [#allocation4], 0
    %s11 = scalar_lea.sflag [#allocation4], 1
    %12 = vsyncpa %s11, 0
    %13 = vsyncpa [#allocation5], 0
    %s14 = scalar_lea.sflag [#allocation5], 1
    %15 = vsyncpa %s14, 0
    loop: start=0, step=1, limit=4
    $region2: #{tpu_custom_call.1} parent=1 // loop_pre_header
      _
    $region3: #{tpu_custom_call.1} parent=1 // loop_header
      %s17 = sphi 0, %s21
      %p18 = scmp.ge.s32.totalorder %s17, 4
      %s24 = sphi 0, %s36
      %s25 = sphi 0, %s32
      %s26 = sphi 0, %s24
      %s27 = sphi 0, %s25
      %s28 = sphi 0, %s26
      %s29 = sphi 0, %s27
      %s41 = sphi 0, %s43
      %s44 = sphi 0, %s41
      %s45 = sphi 0, %s44
      %s61 = sphi 0, %s45
      %s65 = sphi 0, %s65
      %s67 = sphi 0, %s65
      %s68 = sphi 0, %s67
      %s82 = sphi 0, %s68
      %s86 = sphi 0, %s86
      %s88 = sphi 0, %s86
      %s89 = sphi 0, %s88
      %s103 = sphi 0, %s89
      %s107 = sphi 0, %s107
      %s109 = sphi 0, %s107
      %s110 = sphi 0, %s109
      %s124 = sphi 0, %s110
      %s128 = sphi 0, %s128
      %s130 = sphi 0, %s128
      %s131 = sphi 0, %s130
      %s145 = sphi 0, %s131
      %s151 = sphi 0, %s153
      %s154 = sphi 0, %s151
      %s155 = sphi 0, %s154
      %s171 = sphi 0, %s155
    $region4: #{tpu_custom_call.1} parent=1 // loop_header_branch
      %20 = sbr.rel (%p18) target = $region8
    $region5: #{tpu_custom_call.1} parent=1 // loop_body
      %s22 = ssub.s32 %s17, 1
      %s23 = ssub.s32 %s17, 2
      %s30 = sadd.s32 1, %s25
      %p31 = scmp.ge.s32.totalorder %s30, 1
      %s32 = scalar_select %p31, 0, %s30
      %s33 = sadd.s32 1, %s24
      %s34 = scalar_select %p31, %s33, %s24
      %p35 = scmp.ge.s32.totalorder %s34, 2
      %s36 = scalar_select %p35, 0, %s34
      %s37 = ssub.s32 %s24, %s36
      %s38 = ssub.s32 %s25, %s32
      %s39 = sor.u32 %s37, %s38
      %p40 = scmp.eq.s32.totalorder %s39, 0
      %s42 = sadd.s32 %s41, 1
      %s43 = scalar_select %p40, %s41, %s42
      %p46 = pneg %p40
      %p47 = scmp.eq.s32.totalorder %s17, 1
      %p48 = por %p46, %p47
      %p49 = scmp.ne.s32.totalorder %s41, %s44
      %p50 = scmp.eq.s32.totalorder %s17, 0
      %p51 = por %p49, %p50
      %p52 = scmp.ne.s32.totalorder %s41, %s44
      %p53 = scmp.eq.s32.totalorder %s22, 1
      %p54 = por %p52, %p53
      %p55 = scmp.ne.s32.totalorder %s44, %s45
      %p56 = scmp.eq.s32.totalorder %s22, 0
      %p57 = por %p55, %p56
      %p58 = scmp.ne.s32.totalorder %s44, %s45
      %p59 = scmp.eq.s32.totalorder %s23, 1
      %p60 = por %p58, %p59
      %p62 = scmp.ne.s32.totalorder %s45, %s61
      %p63 = scmp.eq.s32.totalorder %s23, 0
      %p64 = por %p62, %p63
      %s66 = sadd.s32 %s65, 1
      %p69 = scmp.eq.s32.totalorder %s17, 1
      %p70 = scmp.ne.s32.totalorder %s65, %s67
      %p71 = scmp.eq.s32.totalorder %s17, 0
      %p72 = por %p70, %p71
      %p73 = scmp.ne.s32.totalorder %s65, %s67
      %p74 = scmp.eq.s32.totalorder %s22, 1
      %p75 = por %p73, %p74
      %p76 = scmp.ne.s32.totalorder %s67, %s68
      %p77 = scmp.eq.s32.totalorder %s22, 0
      %p78 = por %p76, %p77
      %p79 = scmp.ne.s32.totalorder %s67, %s68
      %p80 = scmp.eq.s32.totalorder %s23, 1
      %p81 = por %p79, %p80
      %p83 = scmp.ne.s32.totalorder %s68, %s82
      %p84 = scmp.eq.s32.totalorder %s23, 0
      %p85 = por %p83, %p84
      %s87 = sadd.s32 %s86, 1
      %p90 = scmp.eq.s32.totalorder %s17, 1
      %p91 = scmp.ne.s32.totalorder %s86, %s88
      %p92 = scmp.eq.s32.totalorder %s17, 0
      %p93 = por %p91, %p92
      %p94 = scmp.ne.s32.totalorder %s86, %s88
      %p95 = scmp.eq.s32.totalorder %s22, 1
      %p96 = por %p94, %p95
      %p97 = scmp.ne.s32.totalorder %s88, %s89
      %p98 = scmp.eq.s32.totalorder %s22, 0
      %p99 = por %p97, %p98
      %p100 = scmp.ne.s32.totalorder %s88, %s89
      %p101 = scmp.eq.s32.totalorder %s23, 1
      %p102 = por %p100, %p101
      %p104 = scmp.ne.s32.totalorder %s89, %s103
      %p105 = scmp.eq.s32.totalorder %s23, 0
      %p106 = por %p104, %p105
      %s108 = sadd.s32 %s107, 1
      %p111 = scmp.eq.s32.totalorder %s17, 1
      %p112 = scmp.ne.s32.totalorder %s107, %s109
      %p113 = scmp.eq.s32.totalorder %s17, 0
      %p114 = por %p112, %p113
      %p115 = scmp.ne.s32.totalorder %s107, %s109
      %p116 = scmp.eq.s32.totalorder %s22, 1
      %p117 = por %p115, %p116
      %p118 = scmp.ne.s32.totalorder %s109, %s110
      %p119 = scmp.eq.s32.totalorder %s22, 0
      %p120 = por %p118, %p119
      %p121 = scmp.ne.s32.totalorder %s109, %s110
      %p122 = scmp.eq.s32.totalorder %s23, 1
      %p123 = por %p121, %p122
      %p125 = scmp.ne.s32.totalorder %s110, %s124
      %p126 = scmp.eq.s32.totalorder %s23, 0
      %p127 = por %p125, %p126
      %s129 = sadd.s32 %s128, 1
      %p132 = scmp.eq.s32.totalorder %s17, 1
      %p133 = scmp.ne.s32.totalorder %s128, %s130
      %p134 = scmp.eq.s32.totalorder %s17, 0
      %p135 = por %p133, %p134
      %p136 = scmp.ne.s32.totalorder %s128, %s130
      %p137 = scmp.eq.s32.totalorder %s22, 1
      %p138 = por %p136, %p137
      %p139 = scmp.ne.s32.totalorder %s130, %s131
      %p140 = scmp.eq.s32.totalorder %s22, 0
      %p141 = por %p139, %p140
      %p142 = scmp.ne.s32.totalorder %s130, %s131
      %p143 = scmp.eq.s32.totalorder %s23, 1
      %p144 = por %p142, %p143
      %p146 = scmp.ne.s32.totalorder %s131, %s145
      %p147 = scmp.eq.s32.totalorder %s23, 0
      %p148 = por %p146, %p147
      %s149 = ssub.s32 %s24, %s36
      %p150 = scmp.eq.s32.totalorder %s149, 0
      %s152 = sadd.s32 %s151, 1
      %s153 = scalar_select %p150, %s151, %s152
      %p156 = pneg %p150
      %p157 = scmp.eq.s32.totalorder %s17, 1
      %p158 = por %p156, %p157
      %p159 = scmp.ne.s32.totalorder %s151, %s154
      %p160 = scmp.eq.s32.totalorder %s17, 0
      %p161 = por %p159, %p160
      %p162 = scmp.ne.s32.totalorder %s151, %s154
      %p163 = scmp.eq.s32.totalorder %s22, 1
      %p164 = por %p162, %p163
      %p165 = scmp.ne.s32.totalorder %s154, %s155
      %p166 = scmp.eq.s32.totalorder %s22, 0
      %p167 = por %p165, %p166
      %p168 = scmp.ne.s32.totalorder %s154, %s155
      %p169 = scmp.eq.s32.totalorder %s23, 1
      %p170 = por %p168, %p169
      %p172 = scmp.ne.s32.totalorder %s155, %s171
      %p173 = scmp.eq.s32.totalorder %s23, 0
      %p174 = por %p172, %p173
      %p175 = scmp.le.s32.totalorder 1, %s17
      %p176 = scmp.lt.s32.totalorder %s17, 3
      %p177 = pnand %p175, %p176
      %p178 = pneg %p177
      // Predicated region
      $region9: #{tpu_custom_call.1} parent=5 // pred_check
        _
      $region10: #{tpu_custom_call.1} parent=5 // pred_check_branch
        %180 = sbr.rel (%p177) target = $region12
      $region11: #{tpu_custom_call.1} parent=5 // pred_region
        %s181 = ssub.s32 %s17, 1
        // Predicated region
        $region13: #{tpu_custom_call.1} parent=11 // pred_check
          %p182 = pneg %p78
        $region14: #{tpu_custom_call.1} parent=11 // pred_check_branch
          %184 = sbr.rel (%p182) target = $region16
        $region15: #{tpu_custom_call.1} parent=11 // pred_region
          _
        $region16: #{tpu_custom_call.1} parent=11 // pred_fallthru
          _
        // Predicated region
        $region17: #{tpu_custom_call.1} parent=11 // pred_check
          %p185 = pneg %p99
        $region18: #{tpu_custom_call.1} parent=11 // pred_check_branch
          %187 = sbr.rel (%p185) target = $region20
        $region19: #{tpu_custom_call.1} parent=11 // pred_region
          _
        $region20: #{tpu_custom_call.1} parent=11 // pred_fallthru
          _
        // Predicated region
        $region21: #{tpu_custom_call.1} parent=11 // pred_check
          %p188 = pneg %p120
        $region22: #{tpu_custom_call.1} parent=11 // pred_check_branch
          %190 = sbr.rel (%p188) target = $region24
        $region23: #{tpu_custom_call.1} parent=11 // pred_region
          _
        $region24: #{tpu_custom_call.1} parent=11 // pred_fallthru
          _
        // Predicated region
        $region25: #{tpu_custom_call.1} parent=11 // pred_check
          %p191 = pneg %p141
        $region26: #{tpu_custom_call.1} parent=11 // pred_check_branch
          %193 = sbr.rel (%p191) target = $region28
        $region27: #{tpu_custom_call.1} parent=11 // pred_region
          _
        $region28: #{tpu_custom_call.1} parent=11 // pred_fallthru
          _
      $region12: #{tpu_custom_call.1} parent=5 // pred_fallthru
        _
      %p194 = scmp.lt.s32.totalorder %s17, 2
      // Predicated region
      $region29: #{tpu_custom_call.1} parent=5 // pred_check
        %p195 = pneg %p194
      $region30: #{tpu_custom_call.1} parent=5 // pred_check_branch
        %197 = sbr.rel (%p195) target = $region32
      $region31: #{tpu_custom_call.1} parent=5 // pred_region
        // Predicated region
        $region33: #{tpu_custom_call.1} parent=31 // pred_check
          %p198 = pneg %p51
        $region34: #{tpu_custom_call.1} parent=31 // pred_check_branch
          %200 = sbr.rel (%p198) target = $region36
        $region35: #{tpu_custom_call.1} parent=31 // pred_region
          %s201 = sand.u32 %s41, 1
          %s202 = scalar_lea.sflag [#allocation4], %s201
          %s203 = sand.u32 %s41, 1
          %s204 = smul.addr %s203, 16
          %s205 = scalar_lea.vmem [#allocation3], %s204
          %s206 = smul.u32 2, %s25
          %s208 = ssub.s32 256, 256
          %209 = vsyncadd %s202, %s208
          %s210 = smul.addr %s24, 2
          %s211 = sadd.s32 %s206, %s210
          %s212 = smul.addr %s211, 128
          %s213 = scalar_lea.hbm %s0, %s212
          %s215 = sshll.u32 %s205, 4
          %s216 = int_to_ptr.vmem [resolvable:$true] %s215
          %218 = dma.hbm_to_vmem [thread:$0]  %s213, 256, %s216, %s202
        $region36: #{tpu_custom_call.1} parent=31 // pred_fallthru
          _
      $region32: #{tpu_custom_call.1} parent=5 // pred_fallthru
        _
      %p219 = scmp.le.s32.totalorder 1, %s17
      %p220 = scmp.lt.s32.totalorder %s17, 3
      %p221 = pnand %p219, %p220
      %p222 = pneg %p221
      // Predicated region
      $region37: #{tpu_custom_call.1} parent=5 // pred_check
        _
      $region38: #{tpu_custom_call.1} parent=5 // pred_check_branch
        %224 = sbr.rel (%p221) target = $region40
      $region39: #{tpu_custom_call.1} parent=5 // pred_region
        %s225 = ssub.s32 %s17, 1
        %s226 = sand.u32 %s44, 1
        %s227 = scalar_lea.sflag [#allocation4], %s226
        %s228 = sand.u32 %s44, 1
        %s229 = smul.addr %s228, 16
        %s230 = scalar_lea.vmem [#allocation3], %s229
        // Predicated region
        $region41: #{tpu_custom_call.1} parent=39 // pred_check
          %p231 = pneg %p57
        $region42: #{tpu_custom_call.1} parent=39 // pred_check_branch
          %233 = sbr.rel (%p231) target = $region44
        $region43: #{tpu_custom_call.1} parent=39 // pred_region
          %234 = dma.done %s227, 256
        $region44: #{tpu_custom_call.1} parent=39 // pred_fallthru
          _
        %s235 = sand.u32 %s44, 1
        %s236 = scalar_lea.sflag [#allocation4], %s235
        %s237 = sand.u32 %s44, 1
        %s238 = smul.addr %s237, 16
        %s239 = scalar_lea.vmem [#allocation3], %s238
        %p240 = pneg %p57
        %p241 = pneg %p54
        %p242 = pneg %p78
        %p243 = pneg %p75
        %p244 = pneg %p99
        %p245 = pneg %p96
        %p246 = pneg %p120
        %p247 = pneg %p117
        %p248 = pneg %p141
        %p249 = pneg %p138
        %p250 = pneg %p167
        %p251 = pneg %p164
        %s252 = sand.u32 %s154, 1
        %s253 = scalar_lea.sflag [#allocation5], %s252
        %s254 = sand.u32 %s154, 1
        %s255 = smul.addr %s254, 16
        %s256 = scalar_lea.vmem [#allocation6], %s255
        %s257 = smul.u32 2, %s27
        %p258 = scmp.eq.s32.totalorder %s27, 0
        // Predicated region
        $region45: #{tpu_custom_call.1} parent=39 // pred_check
          %p259 = pneg %p258
        $region46: #{tpu_custom_call.1} parent=39 // pred_check_branch
          %261 = sbr.rel (%p259) target = $region48
        $region47: #{tpu_custom_call.1} parent=39 // pred_region
          %vm262 = vcmask 7168
          %263 = vst.msk [vmem:[#allocation2] sm:$0xff] %vm262, 0.0
        $region48: #{tpu_custom_call.1} parent=39 // pred_fallthru
          _
        %v264 = vld [vmem:[%s230] sm:$0xff]
        %v265 = vld [vmem:[%s230 + $0x8] sm:$0xff]
        %v266 = vld [vmem:[#allocation2] sm:$0xff]
        %v267 = vadd.f32 %v264, %v265
        %268 = vadd.xlane.f32.xlu0 %v267
        %v269 = vpop.xlane.xlu0 %268
        %v270 = vadd.f32 %v266, %v269
        %vm271 = vcmask 7168
        %272 = vst.msk [vmem:[#allocation2] sm:$0xff] %vm271, %v270
        %v273 = vld [vmem:[%s230] sm:$0xff]
        %v274 = vld [vmem:[%s230 + $0x8] sm:$0xff]
        %275 = vst [vmem:[%s256] sm:$0xff] %v273
        %276 = vst [vmem:[%s256 + $0x8] sm:$0xff] %v274
        // Predicated region
        $region49: #{tpu_custom_call.1} parent=39 // pred_check
          %p277 = pneg %p258
        $region50: #{tpu_custom_call.1} parent=39 // pred_check_branch
          %279 = sbr.rel (%p277) target = $region52
        $region51: #{tpu_custom_call.1} parent=39 // pred_region
          %v280 = vld [vmem:[#allocation2] sm:$0xff]
          %v281 = vmul.f32 %v280, 0.00390625
          %v282 = vld [vmem:[%s1] sm:$0x3]
          %v283 = vld [vmem:[%s2] sm:$0x3]
          %vm284 = vcmask 64512
          %v286 = vsel %vm284, %v282, 0
          %288 = vmatprep.subr.mxu0 0.0
          %289 = vmatpush1.msra.mxu0 %v281
          %290 = vmatprep.subr.mxu0 0.0
          %291 = vmatpush1.msra.mxu0 0.0
          %292 = vmatprep.subr.mxu0 0.0
          %293 = vmatpush1.msra.mxu0 0.0
          %294 = vmatprep.subr.mxu0 0.0
          %295 = vmatpush1.msra.mxu0 0.0
          %296 = vmatprep.subr.mxu0 0.0
          %297 = vmatpush1.msra.mxu0 0.0
          %298 = vmatprep.subr.mxu0 0.0
          %299 = vmatpush1.msra.mxu0 0.0
          %300 = vmatprep.subr.mxu0 0.0
          %301 = vmatpush1.msra.mxu0 0.0
          %302 = vmatprep.subr.mxu0 0.0
          %303 = vmatpush1.msra.mxu0 0.0
          %304 = vmatprep.subr.mxu0 0.0
          %305 = vmatpush1.msra.mxu0 0.0
          %306 = vmatprep.subr.mxu0 0.0
          %307 = vmatpush1.msra.mxu0 0.0
          %308 = vmatprep.subr.mxu0 0.0
          %309 = vmatpush1.msra.mxu0 0.0
          %310 = vmatprep.subr.mxu0 0.0
          %311 = vmatpush1.msra.mxu0 0.0
          %312 = vmatprep.subr.mxu0 0.0
          %313 = vmatpush1.msra.mxu0 0.0
          %314 = vmatprep.subr.mxu0 0.0
          %315 = vmatpush1.msra.mxu0 0.0
          %316 = vmatprep.subr.mxu0 0.0
          %317 = vmatpush1.msra.mxu0 0.0
          %318 = vmatprep.subr.mxu0 0.0
          %319 = vmatpush1.msra.mxu0 0.0
          %320 = vmatprep.subr.mxu0 0.0
          %321 = vmatpush1.msra.mxu0 0.0
          %322 = vmatprep.subr.mxu0 0.0
          %323 = vmatpush1.msra.mxu0 0.0
          %324 = vmatprep.subr.mxu0 0.0
          %325 = vmatpush1.msra.mxu0 0.0
          %326 = vmatprep.subr.mxu0 0.0
          %327 = vmatpush1.msra.mxu0 0.0
          %328 = vmatprep.subr.mxu0 0.0
          %329 = vmatpush1.msra.mxu0 0.0
          %330 = vmatprep.subr.mxu0 0.0
          %331 = vmatpush1.msra.mxu0 0.0
          %332 = vmatprep.subr.mxu0 0.0
          %333 = vmatpush1.msra.mxu0 0.0
          %334 = vmatprep.subr.mxu0 0.0
          %335 = vmatpush1.msra.mxu0 0.0
          %336 = vmatprep.subr.mxu0 0.0
          %337 = vmatpush1.msra.mxu0 0.0
          %338 = vmatprep.subr.mxu0 0.0
          %339 = vmatpush1.msra.mxu0 0.0
          %340 = vmatprep.subr.mxu0 0.0
          %341 = vmatpush1.msra.mxu0 0.0
          %342 = vmatprep.subr.mxu0 0.0
          %343 = vmatpush1.msra.mxu0 0.0
          %344 = vmatprep.subr.mxu0 0.0
          %345 = vmatpush1.msra.mxu0 0.0
          %346 = vmatprep.subr.mxu0 0.0
          %347 = vmatpush1.msra.mxu0 0.0
          %348 = vmatprep.subr.mxu0 0.0
          %349 = vmatpush1.msra.mxu0 0.0
          %350 = vmatprep.subr.mxu0 0.0
          %351 = vmatpush1.msra.mxu0 0.0
          %352 = vmatprep.mubr.f32.mxu0 0.0
          %353 = vmatmul.mubr.f32.gmra.mrb[0].mxu0 %v286
          %v354 = vpop.f32.mrb[0].mxu0
          %v355 = vadd.f32 %v283, %v354
          %v356 = vpop.f32.mrb[0].mxu0
          %357 = vdwg.mxu0
          %v358 = vmax.f32 %v355, 0.0
          %v359 = vld [vmem:[%s3] sm:$0xff]
          %v360 = vld [vmem:[%s4] sm:$0xff]
          %vm361 = vcmask 15360
          %v363 = vsel %vm361, %v359, 0
          %vm365 = vcmask 1041408
          %v367 = vsel %vm365, %v358, 0
          %369 = vmatprep.subr.mxu0 0.0
          %370 = vmatpush1.msra.mxu0 %v367
          %371 = vmatprep.subr.mxu0 0.0
          %372 = vmatpush1.msra.mxu0 0.0
          %373 = vmatprep.subr.mxu0 0.0
          %374 = vmatpush1.msra.mxu0 0.0
          %375 = vmatprep.subr.mxu0 0.0
          %376 = vmatpush1.msra.mxu0 0.0
          %377 = vmatprep.subr.mxu0 0.0
          %378 = vmatpush1.msra.mxu0 0.0
          %379 = vmatprep.subr.mxu0 0.0
          %380 = vmatpush1.msra.mxu0 0.0
          %381 = vmatprep.subr.mxu0 0.0
          %382 = vmatpush1.msra.mxu0 0.0
          %383 = vmatprep.subr.mxu0 0.0
          %384 = vmatpush1.msra.mxu0 0.0
          %385 = vmatprep.subr.mxu0 0.0
          %386 = vmatpush1.msra.mxu0 0.0
          %387 = vmatprep.subr.mxu0 0.0
          %388 = vmatpush1.msra.mxu0 0.0
          %389 = vmatprep.subr.mxu0 0.0
          %390 = vmatpush1.msra.mxu0 0.0
          %391 = vmatprep.subr.mxu0 0.0
          %392 = vmatpush1.msra.mxu0 0.0
          %393 = vmatprep.subr.mxu0 0.0
          %394 = vmatpush1.msra.mxu0 0.0
          %395 = vmatprep.subr.mxu0 0.0
          %396 = vmatpush1.msra.mxu0 0.0
          %397 = vmatprep.subr.mxu0 0.0
          %398 = vmatpush1.msra.mxu0 0.0
          %399 = vmatprep.subr.mxu0 0.0
          %400 = vmatpush1.msra.mxu0 0.0
          %401 = vmatprep.subr.mxu0 0.0
          %402 = vmatpush1.msra.mxu0 0.0
          %403 = vmatprep.subr.mxu0 0.0
          %404 = vmatpush1.msra.mxu0 0.0
          %405 = vmatprep.subr.mxu0 0.0
          %406 = vmatpush1.msra.mxu0 0.0
          %407 = vmatprep.subr.mxu0 0.0
          %408 = vmatpush1.msra.mxu0 0.0
          %409 = vmatprep.subr.mxu0 0.0
          %410 = vmatpush1.msra.mxu0 0.0
          %411 = vmatprep.subr.mxu0 0.0
          %412 = vmatpush1.msra.mxu0 0.0
          %413 = vmatprep.subr.mxu0 0.0
          %414 = vmatpush1.msra.mxu0 0.0
          %415 = vmatprep.subr.mxu0 0.0
          %416 = vmatpush1.msra.mxu0 0.0
          %417 = vmatprep.subr.mxu0 0.0
          %418 = vmatpush1.msra.mxu0 0.0
          %419 = vmatprep.subr.mxu0 0.0
          %420 = vmatpush1.msra.mxu0 0.0
          %421 = vmatprep.subr.mxu0 0.0
          %422 = vmatpush1.msra.mxu0 0.0
          %423 = vmatprep.subr.mxu0 0.0
          %424 = vmatpush1.msra.mxu0 0.0
          %425 = vmatprep.subr.mxu0 0.0
          %426 = vmatpush1.msra.mxu0 0.0
          %427 = vmatprep.subr.mxu0 0.0
          %428 = vmatpush1.msra.mxu0 0.0
          %429 = vmatprep.subr.mxu0 0.0
          %430 = vmatpush1.msra.mxu0 0.0
          %431 = vmatprep.subr.mxu0 0.0
          %432 = vmatpush1.msra.mxu0 0.0
          %433 = vmatprep.mubr.f32.mxu0 0.0
          %434 = vmatmul.mubr.f32.gmra.mrb[0].mxu0 %v363
          %v435 = vpop.f32.mrb[0].mxu0
          %v436 = vadd.f32 %v360, %v435
          %v437 = vpop.f32.mrb[0].mxu0
          %438 = vdwg.mxu0
          %v439 = vld [vmem:[%s256] sm:$0xff]
          %v440 = vld [vmem:[%s256 + $0x8] sm:$0xff]
          %442 = vset.pattern.permute.xlu0 0
          %443 = vperm.xlu0 %442, %v436
          %v444 = vpop.permute.xlu0 %443
          %v446 = vmul.f32 %v444, %v439
          %v447 = vmul.f32 %v444, %v440
          %v448 = vmul.f32 %v446, 0.5
          %v449 = vmul.f32 %v447, 0.5
          %v450 = vtanh.pop %v448
          %v451 = vtanh.pop %v449
          %v452 = vmul.f32 %v450, 0.5
          %v453 = vmul.f32 %v451, 0.5
          %v454 = vadd.f32 %v452, 0.5
          %v455 = vadd.f32 %v453, 0.5
          %456 = vst [vmem:[%s256] sm:$0xff] %v454
          %457 = vst [vmem:[%s256 + $0x8] sm:$0xff] %v455
        $region52: #{tpu_custom_call.1} parent=39 // pred_fallthru
          _
        %s458 = sand.u32 %s154, 1
        %s459 = scalar_lea.sflag [#allocation5], %s458
        %s460 = sand.u32 %s154, 1
        %s461 = smul.addr %s460, 16
        %s462 = scalar_lea.vmem [#allocation6], %s461
        // Predicated region
        $region53: #{tpu_custom_call.1} parent=39 // pred_check
          %p463 = pneg %p164
        $region54: #{tpu_custom_call.1} parent=39 // pred_check_branch
          %465 = sbr.rel (%p463) target = $region56
        $region55: #{tpu_custom_call.1} parent=39 // pred_region
          %s467 = ssub.s32 256, 256
          %468 = vsyncadd %s459, %s467
          %s469 = smul.addr %s26, 2
          %s470 = smul.addr %s469, 128
          %s471 = scalar_lea.hbm %s5, %s470
          %s473 = sshll.u32 %s462, 4
          %s474 = int_to_ptr.vmem [resolvable:$true] %s473
          %476 = dma.vmem_to_hbm [thread:$0]  %s474, 256, %s471, %s459
        $region56: #{tpu_custom_call.1} parent=39 // pred_fallthru
          _
      $region40: #{tpu_custom_call.1} parent=5 // pred_fallthru
        _
      %p477 = scmp.le.s32.totalorder 2, %s17
      // Predicated region
      $region57: #{tpu_custom_call.1} parent=5 // pred_check
        %p478 = pneg %p477
      $region58: #{tpu_custom_call.1} parent=5 // pred_check_branch
        %480 = sbr.rel (%p478) target = $region60
      $region59: #{tpu_custom_call.1} parent=5 // pred_region
        %s481 = ssub.s32 %s17, 2
        // Predicated region
        $region61: #{tpu_custom_call.1} parent=59 // pred_check
          %p482 = pneg %p170
        $region62: #{tpu_custom_call.1} parent=59 // pred_check_branch
          %484 = sbr.rel (%p482) target = $region64
        $region63: #{tpu_custom_call.1} parent=59 // pred_region
          %s485 = sand.u32 %s155, 1
          %s486 = scalar_lea.sflag [#allocation5], %s485
          %s487 = sand.u32 %s155, 1
          %s488 = smul.addr %s487, 16
          %s489 = scalar_lea.vmem [#allocation6], %s488
          %490 = dma.done %s486, 256
        $region64: #{tpu_custom_call.1} parent=59 // pred_fallthru
          _
      $region60: #{tpu_custom_call.1} parent=5 // pred_fallthru
        _
    $region6: #{tpu_custom_call.1} parent=1 // loop_footer
      %s21 = sadd.s32 1, %s17
    $region7: #{tpu_custom_call.1} parent=1 // loop_footer_branch
      %16 = sbr.rel target = $region3
    $region8: #{tpu_custom_call.1} parent=1 // loop_exit
      _
    %491 = vsyncpa [#allocation4], 1
    %s492 = scalar_lea.sflag [#allocation4], 1
    %493 = vsyncpa %s492, 1
    %494 = vsyncpa [#allocation5], 1
    %s495 = scalar_lea.sflag [#allocation5], 1
    %496 = vsyncpa %s495, 1

</llo_original>
